<compile_context>
chip_gen: v6e
topology: v6e:2x2x1
jax: 0.10.0
libtpu: 0.0.40
codegen_flags: <defaults>
</compile_context>

<pallas_src>
import functools

import jax
import jax.numpy as jnp
from jax.experimental import pallas as pl
from jax.experimental.pallas import tpu as pltpu


def _round_up(x: int, n: int) -> int:
    return ((x + n - 1) // n) * n


def _vmem_capacity_bytes() -> int:
    try:
        info = pltpu.get_tpu_info()
        cap = getattr(info, "vmem_capacity_bytes", None)
        if cap:
            return int(cap)
    except Exception:
        pass
    return 128 * 1024 * 1024  # v5e/v6e; v7x reports 64 MiB via get_tpu_info


def _ffn_kernel_acc(x_ref, w1_ref, b1_ref, w2_ref, b2_ref, o_ref, acc_ref):
    """FFN step with a separate f32 accumulator (for non-f32 outputs).

    x_ref:  (tm, dim_p)   activation tile (resident across K steps)
    w1_ref: (dim_p, tk)   K-slice of first-layer weight (bf16)
    b1_ref: (1, tk)       K-slice of first-layer bias (f32)
    w2_ref: (tk, dim_p)   K-slice of second-layer weight (bf16)
    b2_ref: (1, dim_p)    second-layer bias (f32)
    o_ref:  (tm, dim_p)   output tile (same block across K -> resident)
    acc_ref:(tm, dim_p)   f32 VMEM accumulator
    """
    k = pl.program_id(1)

    @pl.when(k == 0)
    def _init():
        # Seed with b2 so the finalize step is a pure downcast (no extra add).
        acc_ref[...] = jnp.broadcast_to(b2_ref[...].astype(jnp.float32),
                                        acc_ref.shape)

    h = jnp.dot(x_ref[...].astype(w1_ref.dtype), w1_ref[...],
                preferred_element_type=jnp.float32)
    h = jnp.maximum(h + b1_ref[...], 0.0)
    acc_ref[...] += jnp.dot(h.astype(w2_ref.dtype), w2_ref[...],
                            preferred_element_type=jnp.float32)

    @pl.when(k == pl.num_programs(1) - 1)
    def _finalize():
        o_ref[...] = acc_ref[...].astype(o_ref.dtype)


def _ffn_kernel_inplace(x_ref, w1_ref, b1_ref, w2_ref, b2_ref, o_ref):
    """FFN step accumulating directly into the resident f32 output block."""
    k = pl.program_id(1)

    @pl.when(k == 0)
    def _init():
        o_ref[...] = jnp.broadcast_to(b2_ref[...], o_ref.shape)

    h = jnp.dot(x_ref[...].astype(w1_ref.dtype), w1_ref[...],
                preferred_element_type=jnp.float32)
    h = jnp.maximum(h + b1_ref[...], 0.0)
    o_ref[...] += jnp.dot(h.astype(w2_ref.dtype), w2_ref[...],
                          preferred_element_type=jnp.float32)


def prepare_ffn_params(w1, b1, w2, b2, compute_dtype=jnp.bfloat16):
    """Pad weights/biases to lane-aligned shapes and cast weights to the MXU
    compute dtype ONCE, outside the per-call forward path."""
    dim, inter_dim = w1.shape
    dim_p = _round_up(dim, 128)
    inter_p = _round_up(inter_dim, 128)
    w1_p = jnp.pad(w1, ((0, dim_p - dim),
                        (0, inter_p - inter_dim))).astype(compute_dtype)
    w2_p = jnp.pad(w2, ((0, inter_p - inter_dim),
                        (0, dim_p - dim))).astype(compute_dtype)
    b1_p = jnp.pad(b1.reshape(1, -1).astype(jnp.float32),
                   ((0, 0), (0, inter_p - inter_dim)))
    b2_p = jnp.pad(b2.reshape(1, -1).astype(jnp.float32),
                   ((0, 0), (0, dim_p - dim)))
    return w1_p, b1_p, w2_p, b2_p


@functools.partial(jax.jit, static_argnames=("tm", "tk"))
def ffn_block(x, w1_p, b1_p, w2_p, b2_p, *, tm=None, tk=None):
    """x: (batch, seq, dim) -> (batch, seq, dim).

    w1_p/b1_p/w2_p/b2_p must come from prepare_ffn_params (lane-padded,
    weights in the MXU compute dtype).  tm/tk override the auto-chosen tile
    sizes (rows of x per grid step / inter_dim chunk per reduction step).
    """
    batch, seq, dim = x.shape
    dim_p, inter_p = w1_p.shape
    assert w2_p.shape == (inter_p, dim_p)
    assert dim <= dim_p
    m = batch * seq

    out_dtype = x.dtype
    x_item = jnp.dtype(x.dtype).itemsize
    w_item = jnp.dtype(w1_p.dtype).itemsize
    out_item = jnp.dtype(out_dtype).itemsize
    # f32 outputs accumulate straight into the resident output block; narrower
    # outputs need a separate f32 accumulator scratch.
    use_acc = out_dtype != jnp.float32

    # --- tile selection, derived from the chip's actual VMEM capacity -------
    cap = _vmem_capacity_bytes()
    budget = int(0.60 * cap)  # leave headroom for compiler-internal scratch

    # K (inter_dim) chunk: largest multiple of 128 <= requested that divides
    # the padded inter dim, so there are no ragged K blocks.
    tk_max = min(tk if tk is not None else 512, inter_p)
    tk_sel = 128
    for cand in range(128, tk_max + 1, 128):
        if inter_p % cand == 0:
            tk_sel = cand
    tk = tk_sel

    def footprint(tm_c):
        return (2 * tm_c * dim_p * x_item          # x tile (double-buffered)
                + 2 * dim_p * tk * w_item          # W1 K-slice
                + 2 * tk * dim_p * w_item          # W2 K-slice
                + 2 * tm_c * dim_p * out_item      # output tile
                + 2 * (tk + dim_p) * 4             # biases
                + (tm_c * dim_p * 4 if use_acc else 0))

    sub = {4: 8, 2: 16, 1: 32}[x_item]             # packed sublane granularity
    m_cap = _round_up(m, sub)
    candidates = (tm,) if tm is not None else (1024, 512, 256, 128)
    tm_sel = None
    for cand in candidates:
        cand = _round_up(min(cand, m_cap), sub)
        if footprint(cand) <= budget:
            tm_sel = cand
            break
    if tm_sel is None:
        tm_sel = _round_up(min(candidates[-1], m_cap), sub)
    tm = tm_sel
    m_p = _round_up(m, tm)

    vmem_limit = min(footprint(tm) + (8 << 20), int(0.85 * cap))
    vmem_limit = max(vmem_limit, footprint(tm) + (2 << 20))

    # Activation padding (usually a no-op for production shapes).
    x2d = x.reshape(m, dim)
    if (m_p, dim_p) != (m, dim):
        x2d = jnp.pad(x2d, ((0, m_p - m), (0, dim_p - dim)))

    n_m_tiles = m_p // tm
    cost = pl.CostEstimate(
        flops=4 * m_p * dim_p * inter_p,                        # two matmuls
        transcendentals=0,
        bytes_accessed=(m_p * dim_p * x_item                    # read x
                        + m_p * dim_p * out_item                # write y
                        + n_m_tiles * 2 * dim_p * inter_p * w_item  # W1+W2
                        + (inter_p + dim_p) * 4),               # biases
    )

    if use_acc:
        kernel = _ffn_kernel_acc
        scratch_shapes = [pltpu.VMEM((tm, dim_p), jnp.float32)]
    else:
        kernel = _ffn_kernel_inplace
        scratch_shapes = []

    out2d = pl.pallas_call(
        kernel,
        out_shape=jax.ShapeDtypeStruct((m_p, dim_p), out_dtype),
        grid_spec=pltpu.PrefetchScalarGridSpec(
            num_scalar_prefetch=0,
            grid=(m_p // tm, inter_p // tk),
            in_specs=[
                pl.BlockSpec((tm, dim_p), lambda i, k: (i, 0)),   # x tile
                pl.BlockSpec((dim_p, tk), lambda i, k: (0, k)),   # W1[:, k]
                pl.BlockSpec((1, tk), lambda i, k: (0, k)),       # b1[k]
                pl.BlockSpec((tk, dim_p), lambda i, k: (k, 0)),   # W2[k, :]
                pl.BlockSpec((1, dim_p), lambda i, k: (0, 0)),    # b2
            ],
            out_specs=pl.BlockSpec((tm, dim_p), lambda i, k: (i, 0)),
            scratch_shapes=scratch_shapes,
        ),
        compiler_params=pltpu.CompilerParams(
            dimension_semantics=("parallel", "arbitrary"),
            vmem_limit_bytes=vmem_limit,
        ),
        cost_estimate=cost,
    )(x2d, w1_p, b1_p, w2_p, b2_p)

    return out2d[:m, :dim].reshape(batch, seq, dim)


def init_params(key, dim, inter_dim, dtype=jnp.float32):
    """Deterministic init matching nn.Linear's uniform(-1/sqrt(fan_in), +).
    Weights are stored pre-transposed: (in_features, out_features)."""
    k1, k2, k3, k4 = jax.random.split(key, 4)
    bound1 = 1.0 / (dim ** 0.5)
    bound2 = 1.0 / (inter_dim ** 0.5)
    w1 = jax.random.uniform(k1, (dim, inter_dim), dtype, -bound1, bound1)
    b1 = jax.random.uniform(k2, (inter_dim,), dtype, -bound1, bound1)
    w2 = jax.random.uniform(k3, (inter_dim, dim), dtype, -bound2, bound2)
    b2 = jax.random.uniform(k4, (dim,), dtype, -bound2, bound2)
    return w1, b1, w2, b2


def ffn_reference(x, w1, b1, w2, b2, compute_dtype=jnp.bfloat16):
    """Pure-JAX reference with the same bf16-MXU / f32-accumulate numerics."""
    cd = compute_dtype
    h = jnp.dot(x.astype(cd), w1.astype(cd),
                preferred_element_type=jnp.float32) + b1.astype(jnp.float32)
    h = jnp.maximum(h, 0.0)
    y = jnp.dot(h.astype(cd), w2.astype(cd),
                preferred_element_type=jnp.float32) + b2.astype(jnp.float32)
    return y.astype(x.dtype)


if __name__ == "__main__":
    # --- small smoke test (f32 activations -> in-place accumulation path) ---
    batch, seq, dim, inter_dim = 2, 8, 32, 64
    key = jax.random.PRNGKey(0)
    kx, kp = jax.random.split(key)
    x = jax.random.normal(kx, (batch, seq, dim), jnp.float32)
    w1, b1, w2, b2 = init_params(kp, dim, inter_dim)
    params = prepare_ffn_params(w1, b1, w2, b2)   # pad + bf16 cast, once
    out = ffn_block(x, *params)
    jax.block_until_ready(out)
    ref = ffn_reference(x, w1, b1, w2, b2)
    assert out.shape == (batch, seq, dim)
    assert jnp.allclose(out, ref, atol=2e-3, rtol=2e-3), \
        float(jnp.max(jnp.abs(out - ref)))

    # --- bf16 activations -> f32-scratch accumulation path ------------------
    xb = x.astype(jnp.bfloat16)
    outb = ffn_block(xb, *params)
    jax.block_until_ready(outb)
    refb = ffn_reference(xb, w1, b1, w2, b2)
    assert outb.dtype == jnp.bfloat16
    assert jnp.allclose(outb.astype(jnp.float32), refb.astype(jnp.float32),
                        atol=2e-2, rtol=2e-2)

    # --- multi-tile path: several M tiles and multiple K chunks -------------
    batch2, seq2, dim2, inter2 = 4, 160, 256, 1024
    kx2, kp2 = jax.random.split(jax.random.PRNGKey(1))
    x2 = jax.random.normal(kx2, (batch2, seq2, dim2), jnp.float32)
    raw2 = init_params(kp2, dim2, inter2)
    p2 = prepare_ffn_params(*raw2)
    out2 = ffn_block(x2, *p2, tm=256, tk=256)     # force grid (3, 4)
    jax.block_until_ready(out2)
    ref2 = ffn_reference(x2, *raw2)
    assert jnp.allclose(out2, ref2, atol=5e-3, rtol=5e-3), \
        float(jnp.max(jnp.abs(out2 - ref2)))

    print("KERNEL_OK")
</pallas_src>

<mosaic_0001>
module attributes {stable_mosaic.version = 11 : i64} {
  func.func @_ffn_kernel_inplace(%arg0: i32, %arg1: i32, %arg2: memref<16x128xf32, #tpu.memory_space<vmem>>, %arg3: memref<128x128xbf16, #tpu.memory_space<vmem>>, %arg4: memref<1x128xf32, #tpu.memory_space<vmem>>, %arg5: memref<128x128xbf16, #tpu.memory_space<vmem>>, %arg6: memref<1x128xf32, #tpu.memory_space<vmem>>, %arg7: memref<16x128xf32, #tpu.memory_space<vmem>>) attributes {dimension_semantics = [#tpu.dimension_semantics<parallel>, #tpu.dimension_semantics<arbitrary>], iteration_bounds = array<i64: 1, 1>, scalar_prefetch = 0 : i64, scratch_operands = 0 : i64, tpu.core_type = #tpu.core_type<tc>, window_params = [{transform_indices = @transform_0, window_bounds = array<i64: 16, 128>}, {transform_indices = @transform_1, window_bounds = array<i64: 128, 128>}, {transform_indices = @transform_2, window_bounds = array<i64: 1, 128>}, {transform_indices = @transform_3, window_bounds = array<i64: 128, 128>}, {pipeline_mode = #tpu.pipeline_mode<synchronous>, transform_indices = @transform_4, window_bounds = array<i64: 1, 128>}, {transform_indices = @transform_5, window_bounds = array<i64: 16, 128>}]} {
    %c0_i32 = arith.constant 0 : i32
    %0 = arith.cmpi eq, %arg1, %c0_i32 : i32
    %1 = arith.extui %0 : i1 to i32
    %c0_i32_0 = arith.constant 0 : i32
    %2 = arith.cmpi ne, %1, %c0_i32_0 : i32
    scf.if %2 {
      %c0_14 = arith.constant 0 : index
      %c0_15 = arith.constant 0 : index
      %18 = vector.load %arg6[%c0_14, %c0_15] : memref<1x128xf32, #tpu.memory_space<vmem>>, vector<1x128xf32>
      %19 = vector.shape_cast %18 : vector<1x128xf32> to vector<1x128xf32>
      %20 = vector.broadcast %19 : vector<1x128xf32> to vector<16x128xf32>
      %c0_16 = arith.constant 0 : index
      %c0_17 = arith.constant 0 : index
      %21 = vector.load %arg7[%c0_16, %c0_17] : memref<16x128xf32, #tpu.memory_space<vmem>>, vector<16x128xf32>
      tpu.vector_store %arg7[%c0_16, %c0_17], %20 {strides = array<i32>} : memref<16x128xf32, #tpu.memory_space<vmem>>, vector<16x128xf32>,
    } else {
    }
    %c0 = arith.constant 0 : index
    %c0_1 = arith.constant 0 : index
    %3 = vector.load %arg2[%c0, %c0_1] : memref<16x128xf32, #tpu.memory_space<vmem>>, vector<16x128xf32>
    %4 = arith.truncf %3 : vector<16x128xf32> to vector<16x128xbf16>
    %c0_2 = arith.constant 0 : index
    %c0_3 = arith.constant 0 : index
    %5 = vector.load %arg3[%c0_2, %c0_3] : memref<128x128xbf16, #tpu.memory_space<vmem>>, vector<128x128xbf16>
    %cst = arith.constant dense<0.000000e+00> : vector<16x128xf32>
    %6 = tpu.matmul %4, %5, %cst {dimension_numbers = #tpu.dot_dimension_numbers<[1], [0], [0], [1], [0, 0, 1, 1], [], []>} : vector<16x128xbf16>, vector<128x128xbf16>, vector<16x128xf32> -> vector<16x128xf32>
    %c0_4 = arith.constant 0 : index
    %c0_5 = arith.constant 0 : index
    %7 = vector.load %arg4[%c0_4, %c0_5] : memref<1x128xf32, #tpu.memory_space<vmem>>, vector<1x128xf32>
    %8 = vector.broadcast %7 : vector<1x128xf32> to vector<16x128xf32>
    %9 = arith.addf %6, %8 : vector<16x128xf32>
    %cst_6 = arith.constant 0.000000e+00 : f32
    %10 = vector.broadcast %cst_6 : f32 to vector<16x128xf32>
    %11 = arith.maximumf %9, %10 : vector<16x128xf32>
    %c0_7 = arith.constant 0 : index
    %c0_8 = arith.constant 0 : index
    %12 = vector.load %arg7[%c0_7, %c0_8] : memref<16x128xf32, #tpu.memory_space<vmem>>, vector<16x128xf32>
    %13 = arith.truncf %11 : vector<16x128xf32> to vector<16x128xbf16>
    %c0_9 = arith.constant 0 : index
    %c0_10 = arith.constant 0 : index
    %14 = vector.load %arg5[%c0_9, %c0_10] : memref<128x128xbf16, #tpu.memory_space<vmem>>, vector<128x128xbf16>
    %cst_11 = arith.constant dense<0.000000e+00> : vector<16x128xf32>
    %15 = tpu.matmul %13, %14, %cst_11 {dimension_numbers = #tpu.dot_dimension_numbers<[1], [0], [0], [1], [0, 0, 1, 1], [], []>} : vector<16x128xbf16>, vector<128x128xbf16>, vector<16x128xf32> -> vector<16x128xf32>
    %16 = arith.addf %12, %15 : vector<16x128xf32>
    %c0_12 = arith.constant 0 : index
    %c0_13 = arith.constant 0 : index
    %17 = vector.load %arg7[%c0_12, %c0_13] : memref<16x128xf32, #tpu.memory_space<vmem>>, vector<16x128xf32>
    tpu.vector_store %arg7[%c0_12, %c0_13], %16 {strides = array<i32>} : memref<16x128xf32, #tpu.memory_space<vmem>>, vector<16x128xf32>,
    return
  }
  func.func @transform_0(%arg0: i32, %arg1: i32) -> (i32, i32) {
    %c0_i32 = arith.constant 0 : i32
    %c0_i32_0 = arith.constant 0 : i32
    return %arg0, %c0_i32 : i32, i32
  }
  func.func @transform_1(%arg0: i32, %arg1: i32) -> (i32, i32) {
    %c0_i32 = arith.constant 0 : i32
    %c0_i32_0 = arith.constant 0 : i32
    return %c0_i32, %arg1 : i32, i32
  }
  func.func @transform_2(%arg0: i32, %arg1: i32) -> (i32, i32) {
    %c0_i32 = arith.constant 0 : i32
    %c0_i32_0 = arith.constant 0 : i32
    return %c0_i32, %arg1 : i32, i32
  }
  func.func @transform_3(%arg0: i32, %arg1: i32) -> (i32, i32) {
    %c0_i32 = arith.constant 0 : i32
    %c0_i32_0 = arith.constant 0 : i32
    return %arg1, %c0_i32 : i32, i32
  }
  func.func @transform_4(%arg0: i32, %arg1: i32) -> (i32, i32) {
    %c0_i32 = arith.constant 0 : i32
    %c0_i32_0 = arith.constant 0 : i32
    %c0_i32_1 = arith.constant 0 : i32
    return %c0_i32, %c0_i32_0 : i32, i32
  }
  func.func @transform_5(%arg0: i32, %arg1: i32) -> (i32, i32) {
    %c0_i32 = arith.constant 0 : i32
    %c0_i32_0 = arith.constant 0 : i32
    return %arg0, %c0_i32 : i32, i32
  }
}

</mosaic_0001>

<llo_original>
// kernel: ffn_block.1
$region0: #{ffn_block.1}
  #allocation0 [shape = 'u32[]', space=smem, size = 0x4, offset = 0x4, fixed_abs, tag = 'smem constant byte address 0x4 - core index']
  #allocation1 [shape = 'u32[144,128]{1,0:T(1,128)}', space=vmem, size = 0x12000, scoped, tag = 'internal scratch']
  %s0 = inlined_call_operand.vmem [shape: f32[16,128], index: 0, kind: input, shape index: {}]
  %s1 = inlined_call_operand.hbm [shape: bf16[128,128], index: 1, kind: input, shape index: {}]
  %s2 = inlined_call_operand.vmem [shape: f32[1,128], index: 2, kind: input, shape index: {}]
  %s3 = inlined_call_operand.hbm [shape: bf16[128,128], index: 3, kind: input, shape index: {}]
  %s4 = inlined_call_operand.vmem [shape: f32[1,128], index: 4, kind: input, shape index: {}]
  %s5 = inlined_call_operand.vmem [shape: f32[16,128], index: 5, kind: output, shape index: {}]
  %s6 = sld [smem:[#allocation0]]
  $region42: #{ffn_block.1} parent=0
    _
  %s8 = ssub.s32 1, %s6
  %s9 = scalar_select 0, %s8, %s6
  $region1: #{ffn_block.1} parent=0
    #allocation2 [shape = 'u8[32768]{0}', space=vmem, size = 0x8000, scoped, tag = 'input window, operand 1, single buffered']
    #allocation3 [shape = 's32[1]{0}', space=sflag, size = 0x4, scoped, tag = 'scoped memory for ffn_block.1']
    #allocation4 [shape = 'u8[32768]{0}', space=vmem, size = 0x8000, scoped, tag = 'input window, operand 3, single buffered']
    #allocation5 [shape = 's32[1]{0}', space=sflag, size = 0x4, scoped, tag = 'scoped memory for ffn_block.1']
    %10 = vsyncpa [#allocation3], 0
    %11 = vsyncpa [#allocation5], 0
    // Predicated region
    $region2: #{ffn_block.1} parent=1 // pred_check
      _
    $region3: #{ffn_block.1} parent=1 // pred_check_branch
      %13 = sbr.rel (0) target = $region5
    $region4: #{ffn_block.1} parent=1 // pred_region
      _
    $region5: #{ffn_block.1} parent=1 // pred_fallthru
      _
    // Predicated region
    $region6: #{ffn_block.1} parent=1 // pred_check
      _
    $region7: #{ffn_block.1} parent=1 // pred_check_branch
      %15 = sbr.rel (0) target = $region9
    $region8: #{ffn_block.1} parent=1 // pred_region
      %s17 = ssub.s32 1024, 1024
      %18 = vsyncadd [#allocation3], %s17
      %s19 = sshll.u32 [#allocation2], 4
      %s20 = int_to_ptr.vmem [resolvable:$true] %s19
      %25 = dma.hbm_to_vmem [thread:$0]  %s1, 1024, %s20, [#allocation3], 64, 64, 4
    $region9: #{ffn_block.1} parent=1 // pred_fallthru
      _
    // Predicated region
    $region10: #{ffn_block.1} parent=1 // pred_check
      _
    $region11: #{ffn_block.1} parent=1 // pred_check_branch
      %27 = sbr.rel (0) target = $region13
    $region12: #{ffn_block.1} parent=1 // pred_region
      _
    $region13: #{ffn_block.1} parent=1 // pred_fallthru
      _
    // Predicated region
    $region14: #{ffn_block.1} parent=1 // pred_check
      _
    $region15: #{ffn_block.1} parent=1 // pred_check_branch
      %29 = sbr.rel (0) target = $region17
    $region16: #{ffn_block.1} parent=1 // pred_region
      %s31 = ssub.s32 1024, 1024
      %32 = vsyncadd [#allocation5], %s31
      %s33 = sshll.u32 [#allocation4], 4
      %s34 = int_to_ptr.vmem [resolvable:$true] %s33
      %39 = dma.hbm_to_vmem [thread:$0]  %s3, 1024, %s34, [#allocation5], 64, 64, 4
    $region17: #{ffn_block.1} parent=1 // pred_fallthru
      _
    // Predicated region
    $region18: #{ffn_block.1} parent=1 // pred_check
      _
    $region19: #{ffn_block.1} parent=1 // pred_check_branch
      %41 = sbr.rel (0) target = $region21
    $region20: #{ffn_block.1} parent=1 // pred_region
      _
    $region21: #{ffn_block.1} parent=1 // pred_fallthru
      _
    // Predicated region
    $region22: #{ffn_block.1} parent=1 // pred_check
      _
    $region23: #{ffn_block.1} parent=1 // pred_check_branch
      %43 = sbr.rel (0) target = $region25
    $region24: #{ffn_block.1} parent=1 // pred_region
      %44 = dma.done [#allocation3], 1024
    $region25: #{ffn_block.1} parent=1 // pred_fallthru
      _
    // Predicated region
    $region26: #{ffn_block.1} parent=1 // pred_check
      _
    $region27: #{ffn_block.1} parent=1 // pred_check_branch
      %46 = sbr.rel (0) target = $region29
    $region28: #{ffn_block.1} parent=1 // pred_region
      %47 = dma.done [#allocation5], 1024
    $region29: #{ffn_block.1} parent=1 // pred_fallthru
      _
    %p49 = scmp.eq.s32.totalorder 0, 0
    // Predicated region
    $region30: #{ffn_block.1} parent=1 // pred_check
      %p50 = pneg %p49
    $region31: #{ffn_block.1} parent=1 // pred_check_branch
      %52 = sbr.rel (%p50) target = $region33
    $region32: #{ffn_block.1} parent=1 // pred_region
      %v53 = vld [vmem:[%s4] sm:$0x1]
      %v55 = vlaneseq
      %v56 = vshrl.u32 %v55, 7
      %v57 = vsub.s32 0, %v56
      %v58 = vrot.slane %v53, %v57
      %60 = vst [vmem:[%s5] sm:$0xff] %v58
      %61 = vst [vmem:[%s5 + $0x8] sm:$0xff] %v58
    $region33: #{ffn_block.1} parent=1 // pred_fallthru
      _
    %v62 = vld [vmem:[%s0] sm:$0xff]
    %v63 = vld [vmem:[%s0 + $0x8] sm:$0xff]
    %v64 = vpack.c.bf16 %v63, %v62
    %v65 = vld [vmem:[#allocation2] sm:$0xf]
    %v66 = vld [vmem:[#allocation2 + $0x4] sm:$0xf]
    %v67 = vld [vmem:[#allocation2 + $0x8] sm:$0xf]
    %v68 = vld [vmem:[#allocation2 + $0xc] sm:$0xf]
    %v69 = vld [vmem:[#allocation2 + $0x10] sm:$0xf]
    %v70 = vld [vmem:[#allocation2 + $0x14] sm:$0xf]
    %v71 = vld [vmem:[#allocation2 + $0x18] sm:$0xf]
    %v72 = vld [vmem:[#allocation2 + $0x1c] sm:$0xf]
    %v73 = vld [vmem:[#allocation2 + $0x20] sm:$0xf]
    %v74 = vld [vmem:[#allocation2 + $0x24] sm:$0xf]
    %v75 = vld [vmem:[#allocation2 + $0x28] sm:$0xf]
    %v76 = vld [vmem:[#allocation2 + $0x2c] sm:$0xf]
    %v77 = vld [vmem:[#allocation2 + $0x30] sm:$0xf]
    %v78 = vld [vmem:[#allocation2 + $0x34] sm:$0xf]
    %v79 = vld [vmem:[#allocation2 + $0x38] sm:$0xf]
    %v80 = vld [vmem:[#allocation2 + $0x3c] sm:$0xf]
    %v81 = vld [vmem:[%s2] sm:$0x1]
    %v83 = vlaneseq
    %v84 = vshrl.u32 %v83, 7
    %v85 = vsub.s32 0, %v84
    %v86 = vrot.slane %v81, %v85
    %v104 = vunpack.c.l.b16 %v65
    %v105 = vunpack.c.l.b16 %v66
    %v106 = vunpack.c.l.b16 %v67
    %v107 = vunpack.c.l.b16 %v68
    %v108 = vunpack.c.l.b16 %v69
    %v109 = vunpack.c.l.b16 %v70
    %v110 = vunpack.c.l.b16 %v71
    %v111 = vunpack.c.l.b16 %v72
    %v112 = vunpack.c.l.b16 %v73
    %v113 = vunpack.c.l.b16 %v74
    %v114 = vunpack.c.l.b16 %v75
    %v115 = vunpack.c.l.b16 %v76
    %v116 = vunpack.c.l.b16 %v77
    %v117 = vunpack.c.l.b16 %v78
    %v118 = vunpack.c.l.b16 %v79
    %v119 = vunpack.c.l.b16 %v80
    %v120 = vpack.c.b16 %v105, %v104
    %v121 = vpack.c.b16 %v107, %v106
    %v122 = vpack.c.b16 %v109, %v108
    %v123 = vpack.c.b16 %v111, %v110
    %v124 = vpack.c.b16 %v113, %v112
    %v125 = vpack.c.b16 %v115, %v114
    %v126 = vpack.c.b16 %v117, %v116
    %v127 = vpack.c.b16 %v119, %v118
    %136 = vmatprep.subr.bf16.mxu0 0
    %137 = vmatpush1.bf16.msra.mxu0 %v127
    %138 = vmatprep.subr.bf16.mxu0 0
    %139 = vmatpush1.bf16.msra.mxu0 %v126
    %140 = vmatprep.subr.bf16.mxu0 0
    %141 = vmatpush1.bf16.msra.mxu0 %v125
    %142 = vmatprep.subr.bf16.mxu0 0
    %143 = vmatpush1.bf16.msra.mxu0 %v124
    %144 = vmatprep.subr.bf16.mxu0 0
    %145 = vmatpush1.bf16.msra.mxu0 %v123
    %146 = vmatprep.subr.bf16.mxu0 0
    %147 = vmatpush1.bf16.msra.mxu0 %v122
    %148 = vmatprep.subr.bf16.mxu0 0
    %149 = vmatpush1.bf16.msra.mxu0 %v121
    %150 = vmatprep.subr.bf16.mxu0 0
    %151 = vmatpush1.bf16.msra.mxu0 %v120
    %152 = vmatprep.subr.bf16.mxu0 0
    %153 = vmatpush2.bf16.msra.mxu0 0
    %154 = vmatprep.subr.bf16.mxu0 0
    %155 = vmatpush2.bf16.msra.mxu0 0
    %156 = vmatprep.subr.bf16.mxu0 0
    %157 = vmatpush2.bf16.msra.mxu0 0
    %158 = vmatprep.subr.bf16.mxu0 0
    %159 = vmatpush2.bf16.msra.mxu0 0
    %160 = vmatprep.subr.bf16.mxu0 0
    %161 = vmatpush2.bf16.msra.mxu0 0
    %162 = vmatprep.subr.bf16.mxu0 0
    %163 = vmatpush2.bf16.msra.mxu0 0
    %164 = vmatprep.subr.bf16.mxu0 0
    %165 = vmatpush2.bf16.msra.mxu0 0
    %166 = vmatprep.subr.bf16.mxu0 0
    %167 = vmatpush2.bf16.msra.mxu0 0
    %168 = vmatprep.mubr.bf16.mxu0 0
    %169 = vmatmul.mubr.bf16.gmra.mxu0 %v64
    %v170 = vpop.f32.mrf.mxu0
    %v171 = vadd.f32 %v86, %v170
    %v172 = vpop.f32.mrf.mxu0
    %v173 = vpop.f32.mrf.mxu0
    %v174 = vadd.f32 %v86, %v173
    %v175 = vpop.f32.mrf.mxu0
    %176 = vdwg.mxu0
    %v177 = vmax.f32 %v171, 0.0
    %v178 = vmax.f32 %v174, 0.0
    %v179 = vld [vmem:[%s5] sm:$0xff]
    %v180 = vld [vmem:[%s5 + $0x8] sm:$0xff]
    %v181 = vpack.c.bf16 %v178, %v177
    %v182 = vld [vmem:[#allocation4] sm:$0xf]
    %v183 = vld [vmem:[#allocation4 + $0x4] sm:$0xf]
    %v184 = vld [vmem:[#allocation4 + $0x8] sm:$0xf]
    %v185 = vld [vmem:[#allocation4 + $0xc] sm:$0xf]
    %v186 = vld [vmem:[#allocation4 + $0x10] sm:$0xf]
    %v187 = vld [vmem:[#allocation4 + $0x14] sm:$0xf]
    %v188 = vld [vmem:[#allocation4 + $0x18] sm:$0xf]
    %v189 = vld [vmem:[#allocation4 + $0x1c] sm:$0xf]
    %v190 = vld [vmem:[#allocation4 + $0x20] sm:$0xf]
    %v191 = vld [vmem:[#allocation4 + $0x24] sm:$0xf]
    %v192 = vld [vmem:[#allocation4 + $0x28] sm:$0xf]
    %v193 = vld [vmem:[#allocation4 + $0x2c] sm:$0xf]
    %v194 = vld [vmem:[#allocation4 + $0x30] sm:$0xf]
    %v195 = vld [vmem:[#allocation4 + $0x34] sm:$0xf]
    %v196 = vld [vmem:[#allocation4 + $0x38] sm:$0xf]
    %v197 = vld [vmem:[#allocation4 + $0x3c] sm:$0xf]
    %v214 = vunpack.c.l.b16 %v182
    %v215 = vunpack.c.l.b16 %v183
    %v216 = vunpack.c.l.b16 %v184
    %v217 = vunpack.c.l.b16 %v185
    %v218 = vunpack.c.l.b16 %v186
    %v219 = vunpack.c.l.b16 %v187
    %v220 = vunpack.c.l.b16 %v188
    %v221 = vunpack.c.l.b16 %v189
    %v222 = vunpack.c.l.b16 %v190
    %v223 = vunpack.c.l.b16 %v191
    %v224 = vunpack.c.l.b16 %v192
    %v225 = vunpack.c.l.b16 %v193
    %v226 = vunpack.c.l.b16 %v194
    %v227 = vunpack.c.l.b16 %v195
    %v228 = vunpack.c.l.b16 %v196
    %v229 = vunpack.c.l.b16 %v197
    %v230 = vpack.c.b16 %v215, %v214
    %v231 = vpack.c.b16 %v217, %v216
    %v232 = vpack.c.b16 %v219, %v218
    %v233 = vpack.c.b16 %v221, %v220
    %v234 = vpack.c.b16 %v223, %v222
    %v235 = vpack.c.b16 %v225, %v224
    %v236 = vpack.c.b16 %v227, %v226
    %v237 = vpack.c.b16 %v229, %v228
    %246 = vmatprep.subr.bf16.mxu0 0
    %247 = vmatpush1.bf16.msra.mxu0 %v237
    %248 = vmatprep.subr.bf16.mxu0 0
    %249 = vmatpush1.bf16.msra.mxu0 %v236
    %250 = vmatprep.subr.bf16.mxu0 0
    %251 = vmatpush1.bf16.msra.mxu0 %v235
    %252 = vmatprep.subr.bf16.mxu0 0
    %253 = vmatpush1.bf16.msra.mxu0 %v234
    %254 = vmatprep.subr.bf16.mxu0 0
    %255 = vmatpush1.bf16.msra.mxu0 %v233
    %256 = vmatprep.subr.bf16.mxu0 0
    %257 = vmatpush1.bf16.msra.mxu0 %v232
    %258 = vmatprep.subr.bf16.mxu0 0
    %259 = vmatpush1.bf16.msra.mxu0 %v231
    %260 = vmatprep.subr.bf16.mxu0 0
    %261 = vmatpush1.bf16.msra.mxu0 %v230
    %262 = vmatprep.subr.bf16.mxu0 0
    %263 = vmatpush2.bf16.msra.mxu0 0
    %264 = vmatprep.subr.bf16.mxu0 0
    %265 = vmatpush2.bf16.msra.mxu0 0
    %266 = vmatprep.subr.bf16.mxu0 0
    %267 = vmatpush2.bf16.msra.mxu0 0
    %268 = vmatprep.subr.bf16.mxu0 0
    %269 = vmatpush2.bf16.msra.mxu0 0
    %270 = vmatprep.subr.bf16.mxu0 0
    %271 = vmatpush2.bf16.msra.mxu0 0
    %272 = vmatprep.subr.bf16.mxu0 0
    %273 = vmatpush2.bf16.msra.mxu0 0
    %274 = vmatprep.subr.bf16.mxu0 0
    %275 = vmatpush2.bf16.msra.mxu0 0
    %276 = vmatprep.subr.bf16.mxu0 0
    %277 = vmatpush2.bf16.msra.mxu0 0
    %278 = vmatprep.mubr.bf16.mxu0 0
    %279 = vmatmul.mubr.bf16.gmra.mxu0 %v181
    %v280 = vpop.f32.mrf.mxu0
    %v281 = vadd.f32 0.0, %v280
    %v282 = vpop.f32.mrf.mxu0
    %v283 = vpop.f32.mrf.mxu0
    %v284 = vadd.f32 0.0, %v283
    %v285 = vpop.f32.mrf.mxu0
    %286 = vdwg.mxu0
    %v287 = vadd.f32 %v179, %v281
    %v288 = vadd.f32 %v180, %v284
    %289 = vst [vmem:[%s5] sm:$0xff] %v287
    %290 = vst [vmem:[%s5 + $0x8] sm:$0xff] %v288
    // Predicated region
    $region34: #{ffn_block.1} parent=1 // pred_check
      _
    $region35: #{ffn_block.1} parent=1 // pred_check_branch
      %292 = sbr.rel (0) target = $region37
    $region36: #{ffn_block.1} parent=1 // pred_region
      _
    $region37: #{ffn_block.1} parent=1 // pred_fallthru
      _
    // Predicated region
    $region38: #{ffn_block.1} parent=1 // pred_check
      _
    $region39: #{ffn_block.1} parent=1 // pred_check_branch
      %294 = sbr.rel (0) target = $region41
    $region40: #{ffn_block.1} parent=1 // pred_region
      _
    $region41: #{ffn_block.1} parent=1 // pred_fallthru
      _
    %295 = vsyncpa [#allocation3], 1
    %296 = vsyncpa [#allocation5], 1

</llo_original>
